<compile_context>
chip_gen: v7x
topology: tpu7x:2x2x1
jax: 0.10.0
libtpu: 0.0.40
codegen_flags: <defaults>
</compile_context>

<pallas_src>
import jax
import jax.numpy as jnp
from jax import lax
from jax.experimental import pallas as pl
from jax.experimental.pallas import tpu as pltpu


def _round_up(x, m):
    return ((x + m - 1) // m) * m


def lstm_classifier_kernel(nsteps_ref, pre_ref, whh_ref, lastt_ref, wlab_ref,
                           blab_ref, y_ref, h_sc, c_sc, last_sc):
    # nsteps_ref : SMEM (1,) int32      -- max(lengths), scalar-prefetched
    # pre_ref    : (Tc, Bt, 4*Hp)       -- x @ W_ih^T + (b_ih + b_hh), gate order [i,f,o,g]
    # whh_ref    : (Hp, 4*Hp)           -- W_hh^T, resident across the time axis
    # lastt_ref  : (Bt, 1) int32        -- lengths - 1 per row
    # wlab_ref   : (Hp, Lp), blab_ref : (1, Lp)
    # y_ref      : (Bt, Lp)
    # h_sc/c_sc/last_sc : VMEM (Bt, Hp) f32 scratch, persist across time chunks
    tc = pl.program_id(1)
    Tc = pre_ref.shape[0]
    Hp = whh_ref.shape[0]

    @pl.when(tc == 0)
    def _():
        h_sc[...] = jnp.zeros_like(h_sc)       # init_hidden(): h0 = c0 = zeros
        c_sc[...] = jnp.zeros_like(c_sc)
        last_sc[...] = jnp.zeros_like(last_sc)

    whh = whh_ref[...]                         # resident recurrent weight, load once
    last_t = lastt_ref[...]                    # (Bt, 1) int32

    t0 = tc * Tc
    nsteps = nsteps_ref[0]
    steps = jnp.clip(nsteps - t0, 0, Tc)       # valid timesteps within this chunk

    def step(i, carry):
        h, c, last = carry
        t = t0 + i
        # Input projection already hoisted: only the recurrent matmul is serial.
        gates = (pre_ref[i].astype(jnp.float32)
                 + jnp.dot(h.astype(whh.dtype), whh,
                           preferred_element_type=jnp.float32))
        # gate order [i, f, o, g]: one contiguous lane-aligned sigmoid slice + one tanh
        sig = jax.nn.sigmoid(gates[:, :3 * Hp])
        i_g = sig[:, 0 * Hp:1 * Hp]
        f_g = sig[:, 1 * Hp:2 * Hp]
        o_g = sig[:, 2 * Hp:3 * Hp]
        g_g = jnp.tanh(gates[:, 3 * Hp:4 * Hp])
        c = f_g * c + i_g * g_g
        h = o_g * jnp.tanh(c)
        # last_timestep gather: latch h at t == length-1 for each batch row
        last = jnp.where(last_t == t, h, last)
        return (h, c, last)

    h, c, last = lax.fori_loop(0, steps, step,
                               (h_sc[...], c_sc[...], last_sc[...]))
    h_sc[...] = h
    c_sc[...] = c
    last_sc[...] = last

    @pl.when(tc == pl.num_programs(1) - 1)
    def _():
        # dropout(p=0.5) is identity in eval/inference mode.
        # TODO(synk): training-mode dropout (pltpu.prng_* mask) not implemented.
        lastv = last_sc[...].astype(wlab_ref.dtype)
        y_ref[...] = (jnp.dot(lastv, wlab_ref[...],
                              preferred_element_type=jnp.float32)
                      + blab_ref[...]).astype(y_ref.dtype)


def lstm_classifier_forward(tokens, lengths, params, *, num_batch_tiles=1,
                            t_chunk=None, stream_dtype=jnp.bfloat16,
                            vmem_limit_bytes=64 * 1024 * 1024):
    """LSTMClassifier forward (eval mode).

    tokens  : (B, T) int32 padded token ids
    lengths : (B,)   int32 true lengths, all >= 1 (pack_padded_sequence contract)
    num_batch_tiles : 1 on v5e/v6e (single TC); 2 on v7x so the "parallel" batch
                      axis feeds both TensorCores.
    t_chunk : pre-gate time-chunk length; size so 2 * t_chunk * Bt * 4*Hp * bytes
              stays well under the VMEM budget (64 MiB physical on v7x).
    """
    emb = params["embedding"]                                   # (V, E)
    B, T = tokens.shape
    E = emb.shape[1]
    H = params["w_hh"].shape[1]
    L = params["w_label"].shape[0]

    Hp = _round_up(H, 128)        # lane-aligned per-gate slices in the serial loop
    Lp = _round_up(L, 128)        # unmasked full-lane output store

    # ---- weights: reorder gates [i,f,g,o] -> [i,f,o,g], zero-pad H -> Hp per gate ----
    def reorder_pad_rows(w):
        i, f, g, o = jnp.split(w, 4, axis=0)
        def padh(a):
            pw = [(0, Hp - H)] + [(0, 0)] * (a.ndim - 1)
            return jnp.pad(a, pw)
        return jnp.concatenate([padh(i), padh(f), padh(o), padh(g)], axis=0)

    wih = reorder_pad_rows(params["w_ih"].astype(jnp.float32))               # (4Hp, E)
    b4 = reorder_pad_rows((params["b_ih"] + params["b_hh"]).astype(jnp.float32))  # (4Hp,)
    whh = reorder_pad_rows(params["w_hh"].astype(jnp.float32))               # (4Hp, H)
    whh = jnp.pad(whh, ((0, 0), (0, Hp - H)))                                # (4Hp, Hp)
    whh_t = whh.T.astype(stream_dtype)                                       # (Hp, 4Hp)

    wlab = jnp.pad(params["w_label"].astype(jnp.float32),
                   ((0, Lp - L), (0, Hp - H)))                               # (Lp, Hp)
    wlab_t = wlab.T.astype(stream_dtype)                                     # (Hp, Lp)
    blab = jnp.pad(params["b_label"].astype(jnp.float32), (0, Lp - L)).reshape(1, Lp)

    # ---- batch / time tiling ----
    Bt = _round_up(-(-B // num_batch_tiles), 8)          # sublane-aligned batch tile
    B_pad = Bt * num_batch_tiles
    Tc = t_chunk if t_chunk is not None else min(T, 32)
    T_pad = _round_up(T, Tc)
    n_bt = B_pad // Bt
    n_tc = T_pad // Tc

    # ---- embedding lookup + hoisted input projection (one big XLA/MXU matmul) ----
    x = jnp.take(emb, tokens, axis=0).astype(jnp.float32)                    # (B, T, E)
    if B_pad > B:
        x = jnp.pad(x, ((0, B_pad - B), (0, 0), (0, 0)))
    x_tm = jnp.transpose(x, (1, 0, 2))                                       # (T, B_pad, E)
    pre = (x_tm.reshape(T * B_pad, E) @ wih.T + b4.reshape(1, 4 * Hp))
    pre = pre.reshape(T, B_pad, 4 * Hp)
    if T_pad > T:
        pre = jnp.pad(pre, ((0, T_pad - T), (0, 0), (0, 0)))
    pre = pre.astype(stream_dtype)       # dominant HBM stream; bf16 halves DMA bytes

    lengths = lengths.astype(jnp.int32)                                      # all >= 1
    last_t = lengths - 1
    if B_pad > B:
        last_t = jnp.concatenate([last_t, jnp.zeros((B_pad - B,), jnp.int32)])
    last_t = last_t.reshape(B_pad, 1)

    nsteps = jnp.max(lengths).reshape(1).astype(jnp.int32)

    grid_spec = pltpu.PrefetchScalarGridSpec(
        num_scalar_prefetch=1,                              # nsteps -> SMEM
        grid=(n_bt, n_tc),                                  # (batch tiles, time chunks)
        in_specs=[
            pl.BlockSpec((Tc, Bt, 4 * Hp), lambda bi, tc, ns: (tc, bi, 0)),  # pre chunk
            pl.BlockSpec((Hp, 4 * Hp), lambda bi, tc, ns: (0, 0)),           # W_hh^T
            pl.BlockSpec((Bt, 1), lambda bi, tc, ns: (bi, 0)),               # lengths-1
            pl.BlockSpec((Hp, Lp), lambda bi, tc, ns: (0, 0)),               # W_label^T
            pl.BlockSpec((1, Lp), lambda bi, tc, ns: (0, 0)),                # b_label
        ],
        out_specs=pl.BlockSpec((Bt, Lp), lambda bi, tc, ns: (bi, 0)),
        scratch_shapes=[pltpu.VMEM((Bt, Hp), jnp.float32)] * 3,              # h, c, last
    )

    y_pad = pl.pallas_call(
        lstm_classifier_kernel,
        out_shape=jax.ShapeDtypeStruct((B_pad, Lp), jnp.float32),
        grid_spec=grid_spec,
        compiler_params=pltpu.CompilerParams(
            dimension_semantics=("parallel", "arbitrary"),
            vmem_limit_bytes=vmem_limit_bytes),
    )(nsteps, pre, whh_t, last_t, wlab_t, blab)
    return y_pad[:B, :L]


def reference_forward(tokens, lengths, params):
    """Plain-JAX reference mirroring the PyTorch packed-LSTM forward (eval mode)."""
    emb = params["embedding"]
    x = jnp.take(emb, tokens, axis=0)                           # (B, T, E)
    B, T, E = x.shape
    H = params["w_hh"].shape[1]
    wih_t, whh_t = params["w_ih"].T, params["w_hh"].T
    b = params["b_ih"] + params["b_hh"]

    def step(carry, x_t):
        h, c = carry
        gates = x_t @ wih_t + h @ whh_t + b
        i = jax.nn.sigmoid(gates[:, 0 * H:1 * H])
        f = jax.nn.sigmoid(gates[:, 1 * H:2 * H])
        g = jnp.tanh(gates[:, 2 * H:3 * H])
        o = jax.nn.sigmoid(gates[:, 3 * H:4 * H])
        c = f * c + i * g
        h = o * jnp.tanh(c)
        return (h, c), h

    h0 = jnp.zeros((B, H), jnp.float32)
    c0 = jnp.zeros((B, H), jnp.float32)
    _, hs = jax.lax.scan(step, (h0, c0), jnp.transpose(x, (1, 0, 2)))   # (T, B, H)
    hs = jnp.transpose(hs, (1, 0, 2))                                   # (B, T, H)
    last = hs[jnp.arange(B), lengths - 1]                               # (B, H)
    return last @ params["w_label"].T + params["b_label"]


def init_params(key, vocab_size, embedding_dim, hidden_dim, label_size):
    ks = jax.random.split(key, 8)
    s = 0.1
    return {
        "embedding": jax.random.normal(ks[0], (vocab_size, embedding_dim), jnp.float32) * s,
        "w_ih": jax.random.normal(ks[1], (4 * hidden_dim, embedding_dim), jnp.float32) * s,
        "w_hh": jax.random.normal(ks[2], (4 * hidden_dim, hidden_dim), jnp.float32) * s,
        "b_ih": jax.random.normal(ks[3], (4 * hidden_dim,), jnp.float32) * s,
        "b_hh": jax.random.normal(ks[4], (4 * hidden_dim,), jnp.float32) * s,
        # hidden2hidden1 is declared in the PyTorch module but unused in forward();
        # parameters created only to mirror __init__.
        "w_h2h1": jax.random.normal(ks[5], (hidden_dim, hidden_dim), jnp.float32) * s,
        "b_h2h1": jnp.zeros((hidden_dim,), jnp.float32),
        "w_label": jax.random.normal(ks[6], (label_size, hidden_dim), jnp.float32) * s,
        "b_label": jax.random.normal(ks[7], (label_size,), jnp.float32) * s,
    }


if __name__ == "__main__":
    vocab_size, embedding_dim, hidden_dim, label_size = 50, 16, 32, 4
    batch_size, seq_len = 4, 8

    key = jax.random.PRNGKey(0)
    k_tok, k_par = jax.random.split(key)
    tokens = jax.random.randint(k_tok, (batch_size, seq_len), 0, vocab_size, jnp.int32)
    # pack_padded_sequence contract: lengths sorted descending, all >= 1
    lengths = jnp.array([8, 7, 5, 3], dtype=jnp.int32)
    assert int(lengths.min()) >= 1
    params = init_params(k_par, vocab_size, embedding_dim, hidden_dim, label_size)

    y_ref = reference_forward(tokens, lengths, params)

    # f32 stream: tight numerical check (single batch tile, single time chunk).
    y32 = lstm_classifier_forward(tokens, lengths, params, stream_dtype=jnp.float32)
    y32 = jax.block_until_ready(y32)
    assert y32.shape == (batch_size, label_size)
    assert jnp.allclose(y32, y_ref, atol=1e-4, rtol=1e-4), (y32, y_ref)

    # Exercise the multi-time-chunk / multi-batch-tile pipeline (v7x-style config).
    y32b = lstm_classifier_forward(tokens, lengths, params, stream_dtype=jnp.float32,
                                   num_batch_tiles=2, t_chunk=4)
    y32b = jax.block_until_ready(y32b)
    assert jnp.allclose(y32b, y_ref, atol=1e-4, rtol=1e-4), (y32b, y_ref)

    # Production default: bf16 streamed pre-gates / weights (looser tolerance).
    ybf = lstm_classifier_forward(tokens, lengths, params)      # stream_dtype=bf16
    ybf = jax.block_until_ready(ybf)
    assert ybf.shape == (batch_size, label_size)
    assert jnp.allclose(ybf, y_ref, atol=5e-2, rtol=5e-2), (ybf, y_ref)

    print("KERNEL_OK")
</pallas_src>

<mosaic_0001>
module attributes {stable_mosaic.version = 11 : i64} {
  func.func @lstm_classifier_kernel(%arg0: i32, %arg1: i32, %arg2: memref<1xi32, #tpu.memory_space<smem>>, %arg3: memref<8x8x512xf32, #tpu.memory_space<vmem>>, %arg4: memref<128x512xf32, #tpu.memory_space<vmem>>, %arg5: memref<8x1xi32, #tpu.memory_space<vmem>>, %arg6: memref<128x128xf32, #tpu.memory_space<vmem>>, %arg7: memref<1x128xf32, #tpu.memory_space<vmem>>, %arg8: memref<8x128xf32, #tpu.memory_space<vmem>>, %arg9: memref<8x128xf32, #tpu.memory_space<vmem>>, %arg10: memref<8x128xf32, #tpu.memory_space<vmem>>, %arg11: memref<8x128xf32, #tpu.memory_space<vmem>>) attributes {dimension_semantics = [#tpu.dimension_semantics<parallel>, #tpu.dimension_semantics<arbitrary>], iteration_bounds = array<i64: 1, 1>, scalar_prefetch = 1 : i64, scratch_operands = 3 : i64, tpu.core_type = #tpu.core_type<tc>, window_params = [{transform_indices = @transform_0, window_bounds = array<i64: 8, 8, 512>}, {pipeline_mode = #tpu.pipeline_mode<synchronous>, transform_indices = @transform_1, window_bounds = array<i64: 128, 512>}, {transform_indices = @transform_2, window_bounds = array<i64: 8, 1>}, {pipeline_mode = #tpu.pipeline_mode<synchronous>, transform_indices = @transform_3, window_bounds = array<i64: 128, 128>}, {pipeline_mode = #tpu.pipeline_mode<synchronous>, transform_indices = @transform_4, window_bounds = array<i64: 1, 128>}, {transform_indices = @transform_5, window_bounds = array<i64: 8, 128>}]} {
    %c0_i32 = arith.constant 0 : i32
    %0 = arith.cmpi eq, %arg1, %c0_i32 : i32
    %1 = arith.extui %0 : i1 to i32
    %c0_i32_0 = arith.constant 0 : i32
    %2 = arith.cmpi ne, %1, %c0_i32_0 : i32
    scf.if %2 {
      %cst = arith.constant 0.000000e+00 : f32
      %22 = vector.broadcast %cst : f32 to vector<8x128xf32>
      %c0_22 = arith.constant 0 : index
      %c0_23 = arith.constant 0 : index
      %23 = vector.load %arg9[%c0_22, %c0_23] : memref<8x128xf32, #tpu.memory_space<vmem>>, vector<8x128xf32>
      tpu.vector_store %arg9[%c0_22, %c0_23], %22 {strides = array<i32>} : memref<8x128xf32, #tpu.memory_space<vmem>>, vector<8x128xf32>,
      %cst_24 = arith.constant 0.000000e+00 : f32
      %24 = vector.broadcast %cst_24 : f32 to vector<8x128xf32>
      %c0_25 = arith.constant 0 : index
      %c0_26 = arith.constant 0 : index
      %25 = vector.load %arg10[%c0_25, %c0_26] : memref<8x128xf32, #tpu.memory_space<vmem>>, vector<8x128xf32>
      tpu.vector_store %arg10[%c0_25, %c0_26], %24 {strides = array<i32>} : memref<8x128xf32, #tpu.memory_space<vmem>>, vector<8x128xf32>,
      %cst_27 = arith.constant 0.000000e+00 : f32
      %26 = vector.broadcast %cst_27 : f32 to vector<8x128xf32>
      %c0_28 = arith.constant 0 : index
      %c0_29 = arith.constant 0 : index
      %27 = vector.load %arg11[%c0_28, %c0_29] : memref<8x128xf32, #tpu.memory_space<vmem>>, vector<8x128xf32>
      tpu.vector_store %arg11[%c0_28, %c0_29], %26 {strides = array<i32>} : memref<8x128xf32, #tpu.memory_space<vmem>>, vector<8x128xf32>,
    } else {
    }
    %c0 = arith.constant 0 : index
    %c0_1 = arith.constant 0 : index
    %3 = vector.load %arg4[%c0, %c0_1] : memref<128x512xf32, #tpu.memory_space<vmem>>, vector<128x512xf32>
    %c0_2 = arith.constant 0 : index
    %c0_3 = arith.constant 0 : index
    %4 = vector.load %arg5[%c0_2, %c0_3] : memref<8x1xi32, #tpu.memory_space<vmem>>, vector<8x1xi32>
    %c8_i32 = arith.constant 8 : i32
    %5 = arith.muli %arg1, %c8_i32 : i32
    %c0_4 = arith.constant 0 : index
    %6 = memref.load %arg2[%c0_4] : memref<1xi32, #tpu.memory_space<smem>>
    %7 = arith.subi %6, %5 : i32
    %c0_i32_5 = arith.constant 0 : i32
    %c8_i32_6 = arith.constant 8 : i32
    %8 = arith.maxsi %c0_i32_5, %7 : i32
    %9 = arith.minsi %c8_i32_6, %8 : i32
    %c0_7 = arith.constant 0 : index
    %c0_8 = arith.constant 0 : index
    %10 = vector.load %arg9[%c0_7, %c0_8] : memref<8x128xf32, #tpu.memory_space<vmem>>, vector<8x128xf32>
    %c0_9 = arith.constant 0 : index
    %c0_10 = arith.constant 0 : index
    %11 = vector.load %arg10[%c0_9, %c0_10] : memref<8x128xf32, #tpu.memory_space<vmem>>, vector<8x128xf32>
    %c0_11 = arith.constant 0 : index
    %c0_12 = arith.constant 0 : index
    %12 = vector.load %arg11[%c0_11, %c0_12] : memref<8x128xf32, #tpu.memory_space<vmem>>, vector<8x128xf32>
    %c0_i32_13 = arith.constant 0 : i32
    %13 = arith.subi %9, %c0_i32_13 : i32
    %14 = arith.addi %c0_i32_13, %13 : i32
    %c1_i32 = arith.constant 1 : i32
    %15:3 = scf.for %arg12 = %c0_i32_13 to %14 step %c1_i32 iter_args(%arg13 = %10, %arg14 = %11, %arg15 = %12) -> (vector<8x128xf32>, vector<8x128xf32>, vector<8x128xf32>)  : i32 {
      %22 = arith.addi %5, %arg12 : i32
      %23 = arith.index_cast %arg12 : i32 to index
      %c0_22 = arith.constant 0 : index
      %c0_23 = arith.constant 0 : index
      %24 = vector.load %arg3[%23, %c0_22, %c0_23] : memref<8x8x512xf32, #tpu.memory_space<vmem>>, vector<1x8x512xf32>
      %25 = vector.shape_cast %24 : vector<1x8x512xf32> to vector<8x512xf32>
      %cst = arith.constant dense<0.000000e+00> : vector<8x512xf32>
      %26 = tpu.matmul %arg13, %3, %cst {dimension_numbers = #tpu.dot_dimension_numbers<[1], [0], [0], [1], [0, 0, 1, 1], [], []>} : vector<8x128xf32>, vector<128x512xf32>, vector<8x512xf32> -> vector<8x512xf32>
      %27 = arith.addf %25, %26 : vector<8x512xf32>
      %28 = vector.extract_strided_slice %27 {offsets = [0, 0], sizes = [8, 384], strides = [1, 1]} : vector<8x512xf32> to vector<8x384xf32>
      %29 = arith.negf %28 : vector<8x384xf32>
      %30 = math.exp %29 : vector<8x384xf32>
      %cst_24 = arith.constant 1.000000e+00 : f32
      %31 = vector.broadcast %cst_24 : f32 to vector<8x384xf32>
      %32 = arith.addf %31, %30 : vector<8x384xf32>
      %33 = arith.divf %31, %32 : vector<8x384xf32>
      %34 = vector.extract_strided_slice %33 {offsets = [0, 0], sizes = [8, 128], strides = [1, 1]} : vector<8x384xf32> to vector<8x128xf32>
      %35 = vector.extract_strided_slice %33 {offsets = [0, 128], sizes = [8, 128], strides = [1, 1]} : vector<8x384xf32> to vector<8x128xf32>
      %36 = vector.extract_strided_slice %33 {offsets = [0, 256], sizes = [8, 128], strides = [1, 1]} : vector<8x384xf32> to vector<8x128xf32>
      %37 = vector.extract_strided_slice %27 {offsets = [0, 384], sizes = [8, 128], strides = [1, 1]} : vector<8x512xf32> to vector<8x128xf32>
      %38 = math.tanh %37 : vector<8x128xf32>
      %39 = arith.mulf %35, %arg14 : vector<8x128xf32>
      %40 = arith.mulf %34, %38 : vector<8x128xf32>
      %41 = arith.addf %39, %40 : vector<8x128xf32>
      %42 = math.tanh %41 : vector<8x128xf32>
      %43 = arith.mulf %36, %42 : vector<8x128xf32>
      %44 = vector.broadcast %22 : i32 to vector<8x1xi32>
      %45 = arith.cmpi eq, %4, %44 : vector<8x1xi32>
      %46 = vector.shape_cast %45 : vector<8x1xi1> to vector<8x1xi1>
      %47 = vector.broadcast %46 : vector<8x1xi1> to vector<8x128xi1>
      %48 = arith.select %47, %43, %arg15 : vector<8x128xi1>, vector<8x128xf32>
      scf.yield %43, %41, %48 : vector<8x128xf32>, vector<8x128xf32>, vector<8x128xf32>
    }
    %c0_14 = arith.constant 0 : index
    %c0_15 = arith.constant 0 : index
    %16 = vector.load %arg9[%c0_14, %c0_15] : memref<8x128xf32, #tpu.memory_space<vmem>>, vector<8x128xf32>
    tpu.vector_store %arg9[%c0_14, %c0_15], %15#0 {strides = array<i32>} : memref<8x128xf32, #tpu.memory_space<vmem>>, vector<8x128xf32>,
    %c0_16 = arith.constant 0 : index
    %c0_17 = arith.constant 0 : index
    %17 = vector.load %arg10[%c0_16, %c0_17] : memref<8x128xf32, #tpu.memory_space<vmem>>, vector<8x128xf32>
    tpu.vector_store %arg10[%c0_16, %c0_17], %15#1 {strides = array<i32>} : memref<8x128xf32, #tpu.memory_space<vmem>>, vector<8x128xf32>,
    %c0_18 = arith.constant 0 : index
    %c0_19 = arith.constant 0 : index
    %18 = vector.load %arg11[%c0_18, %c0_19] : memref<8x128xf32, #tpu.memory_space<vmem>>, vector<8x128xf32>
    tpu.vector_store %arg11[%c0_18, %c0_19], %15#2 {strides = array<i32>} : memref<8x128xf32, #tpu.memory_space<vmem>>, vector<8x128xf32>,
    %c0_i32_20 = arith.constant 0 : i32
    %19 = arith.cmpi eq, %arg1, %c0_i32_20 : i32
    %20 = arith.extui %19 : i1 to i32
    %c0_i32_21 = arith.constant 0 : i32
    %21 = arith.cmpi ne, %20, %c0_i32_21 : i32
    scf.if %21 {
      %c0_22 = arith.constant 0 : index
      %c0_23 = arith.constant 0 : index
      %22 = vector.load %arg11[%c0_22, %c0_23] : memref<8x128xf32, #tpu.memory_space<vmem>>, vector<8x128xf32>
      %c0_24 = arith.constant 0 : index
      %c0_25 = arith.constant 0 : index
      %23 = vector.load %arg6[%c0_24, %c0_25] : memref<128x128xf32, #tpu.memory_space<vmem>>, vector<128x128xf32>
      %cst = arith.constant dense<0.000000e+00> : vector<8x128xf32>
      %24 = tpu.matmul %22, %23, %cst {dimension_numbers = #tpu.dot_dimension_numbers<[1], [0], [0], [1], [0, 0, 1, 1], [], []>} : vector<8x128xf32>, vector<128x128xf32>, vector<8x128xf32> -> vector<8x128xf32>
      %c0_26 = arith.constant 0 : index
      %c0_27 = arith.constant 0 : index
      %25 = vector.load %arg7[%c0_26, %c0_27] : memref<1x128xf32, #tpu.memory_space<vmem>>, vector<1x128xf32>
      %26 = vector.broadcast %25 : vector<1x128xf32> to vector<8x128xf32>
      %27 = arith.addf %24, %26 : vector<8x128xf32>
      %c0_28 = arith.constant 0 : index
      %c0_29 = arith.constant 0 : index
      %28 = vector.load %arg8[%c0_28, %c0_29] : memref<8x128xf32, #tpu.memory_space<vmem>>, vector<8x128xf32>
      tpu.vector_store %arg8[%c0_28, %c0_29], %27 {strides = array<i32>} : memref<8x128xf32, #tpu.memory_space<vmem>>, vector<8x128xf32>,
    } else {
    }
    return
  }
  func.func @transform_0(%arg0: i32, %arg1: i32, %arg2: memref<1xi32, #tpu.memory_space<smem>>) -> (i32, i32, i32) {
    %c0_i32 = arith.constant 0 : i32
    %c0_i32_0 = arith.constant 0 : i32
    return %arg1, %arg0, %c0_i32 : i32, i32, i32
  }
  func.func @transform_1(%arg0: i32, %arg1: i32, %arg2: memref<1xi32, #tpu.memory_space<smem>>) -> (i32, i32) {
    %c0_i32 = arith.constant 0 : i32
    %c0_i32_0 = arith.constant 0 : i32
    %c0_i32_1 = arith.constant 0 : i32
    return %c0_i32, %c0_i32_0 : i32, i32
  }
  func.func @transform_2(%arg0: i32, %arg1: i32, %arg2: memref<1xi32, #tpu.memory_space<smem>>) -> (i32, i32) {
    %c0_i32 = arith.constant 0 : i32
    %c0_i32_0 = arith.constant 0 : i32
    return %arg0, %c0_i32 : i32, i32
  }
  func.func @transform_3(%arg0: i32, %arg1: i32, %arg2: memref<1xi32, #tpu.memory_space<smem>>) -> (i32, i32) {
    %c0_i32 = arith.constant 0 : i32
    %c0_i32_0 = arith.constant 0 : i32
    %c0_i32_1 = arith.constant 0 : i32
    return %c0_i32, %c0_i32_0 : i32, i32
  }
  func.func @transform_4(%arg0: i32, %arg1: i32, %arg2: memref<1xi32, #tpu.memory_space<smem>>) -> (i32, i32) {
    %c0_i32 = arith.constant 0 : i32
    %c0_i32_0 = arith.constant 0 : i32
    %c0_i32_1 = arith.constant 0 : i32
    return %c0_i32, %c0_i32_0 : i32, i32
  }
  func.func @transform_5(%arg0: i32, %arg1: i32, %arg2: memref<1xi32, #tpu.memory_space<smem>>) -> (i32, i32) {
    %c0_i32 = arith.constant 0 : i32
    %c0_i32_0 = arith.constant 0 : i32
    return %arg0, %c0_i32 : i32, i32
  }
}

</mosaic_0001>

<llo_original>
// kernel: tpu_custom_call.1
$region0: #{tpu_custom_call.1}
  #allocation0 [shape = 'u32[]', space=smem, size = 0x4, offset = 0x4, fixed_abs, tag = 'smem constant byte address 0x4 - core index']
  #allocation1 [shape = 'u32[144,128]{1,0:T(1,128)}', space=vmem, size = 0x12000, scoped, tag = 'internal scratch']
  #allocation2 [shape = 'f32[8,128]{1,0:T(8,128)}', space=vmem, size = 0x1000, scoped, tag = 'scratch operand']
  #allocation3 [shape = 'f32[8,128]{1,0:T(8,128)}', space=vmem, size = 0x1000, scoped, tag = 'scratch operand']
  #allocation4 [shape = 'f32[8,128]{1,0:T(8,128)}', space=vmem, size = 0x1000, scoped, tag = 'scratch operand']
  #allocation5 [shape = 's32[1]{0}', space=sflag, size = 0x4, scoped, tag = 'scoped memory for tpu_custom_call.1']
  #allocation6 [shape = 's32[1]{0:T(128)S(6)}', space=smem, size = 0x200, scoped, tag = 'prefetched SMEM operand 0']
  %s0 = inlined_call_operand.<no memory space> [shape: s32[1], index: 0, kind: input, shape index: {}]
  %s1 = inlined_call_operand.hbm [shape: f32[8,8,512], index: 1, kind: input, shape index: {}]
  %s2 = inlined_call_operand.hbm [shape: f32[128,512], index: 2, kind: input, shape index: {}]
  %s3 = inlined_call_operand.hbm [shape: s32[8,1], index: 3, kind: input, shape index: {}]
  %s4 = inlined_call_operand.hbm [shape: f32[128,128], index: 4, kind: input, shape index: {}]
  %s5 = inlined_call_operand.hbm [shape: f32[1,128], index: 5, kind: input, shape index: {}]
  %s6 = inlined_call_operand.hbm [shape: f32[8,128], index: 6, kind: output, shape index: {}]
  %s7 = sld [smem:[#allocation0]]
  $region65: #{tpu_custom_call.1} parent=0
    _
  %s9 = ssub.s32 1, %s7
  %s10 = scalar_select 0, %s9, %s7
  %11 = sst [smem:[#allocation6]] %s0
  $region1: #{tpu_custom_call.1} parent=0
    #allocation7 [shape = 'u8[131072]{0}', space=vmem, size = 0x20000, scoped, tag = 'input window, operand 1, single buffered']
    #allocation8 [shape = 's32[1]{0}', space=sflag, size = 0x4, scoped, tag = 'scoped memory for tpu_custom_call.1']
    #allocation9 [shape = 's32[1]{0}', space=sflag, size = 0x4, scoped, tag = 'scoped memory for tpu_custom_call.1']
    #allocation10 [shape = 'u8[262144]{0}', space=vmem, size = 0x40000, scoped, tag = 'input window, operand 2, single buffered']
    #allocation11 [shape = 's32[1]{0}', space=sflag, size = 0x4, scoped, tag = 'scoped memory for tpu_custom_call.1']
    #allocation12 [shape = 'u8[4096]{0}', space=vmem, size = 0x1000, scoped, tag = 'input window, operand 3, single buffered']
    #allocation13 [shape = 'u8[65536]{0}', space=vmem, size = 0x10000, scoped, tag = 'input window, operand 4, single buffered']
    #allocation14 [shape = 's32[1]{0}', space=sflag, size = 0x4, scoped, tag = 'scoped memory for tpu_custom_call.1']
    #allocation15 [shape = 'u8[512]{0}', space=vmem, size = 0x400, scoped, tag = 'input window, operand 5, single buffered']
    #allocation16 [shape = 'u8[4096]{0}', space=vmem, size = 0x1000, scoped, tag = 'output window, operand 0, single buffered']
    %12 = vsyncpa [#allocation8], 0
    %13 = vsyncpa [#allocation11], 0
    %14 = vsyncpa [#allocation14], 0
    %15 = vsyncpa [#allocation9], 0
    // Predicated region
    $region2: #{tpu_custom_call.1} parent=1 // pred_check
      _
    $region3: #{tpu_custom_call.1} parent=1 // pred_check_branch
      %17 = sbr.rel (0) target = $region5
    $region4: #{tpu_custom_call.1} parent=1 // pred_region
      %s19 = ssub.s32 4096, 4096
      %20 = vsyncadd [#allocation8], %s19
      %s21 = sshll.u32 [#allocation7], 4
      %s22 = int_to_ptr.vmem [resolvable:$true] %s21
      %27 = dma.hbm_to_vmem [thread:$0]  %s1, 4096, %s22, [#allocation8], 512, 512, 32
    $region5: #{tpu_custom_call.1} parent=1 // pred_fallthru
      _
    // Predicated region
    $region6: #{tpu_custom_call.1} parent=1 // pred_check
      _
    $region7: #{tpu_custom_call.1} parent=1 // pred_check_branch
      %29 = sbr.rel (0) target = $region9
    $region8: #{tpu_custom_call.1} parent=1 // pred_region
      %s31 = ssub.s32 8192, 8192
      %32 = vsyncadd [#allocation11], %s31
      %s33 = sshll.u32 [#allocation10], 4
      %s34 = int_to_ptr.vmem [resolvable:$true] %s33
      %39 = dma.hbm_to_vmem [thread:$0]  %s2, 8192, %s34, [#allocation11], 512, 512, 32
    $region9: #{tpu_custom_call.1} parent=1 // pred_fallthru
      _
    // Predicated region
    $region10: #{tpu_custom_call.1} parent=1 // pred_check
      _
    $region11: #{tpu_custom_call.1} parent=1 // pred_check_branch
      %41 = sbr.rel (0) target = $region13
    $region12: #{tpu_custom_call.1} parent=1 // pred_region
      %s43 = ssub.s32 128, 128
      %44 = vsyncadd [#allocation11], %s43
      %s46 = sshll.u32 [#allocation12], 4
      %s47 = int_to_ptr.vmem [resolvable:$true] %s46
      %49 = dma.hbm_to_vmem [thread:$0]  %s3, 128, %s47, [#allocation11]
    $region13: #{tpu_custom_call.1} parent=1 // pred_fallthru
      _
    // Predicated region
    $region14: #{tpu_custom_call.1} parent=1 // pred_check
      _
    $region15: #{tpu_custom_call.1} parent=1 // pred_check_branch
      %51 = sbr.rel (0) target = $region17
    $region16: #{tpu_custom_call.1} parent=1 // pred_region
      %s53 = ssub.s32 2048, 2048
      %54 = vsyncadd [#allocation14], %s53
      %s55 = sshll.u32 [#allocation13], 4
      %s56 = int_to_ptr.vmem [resolvable:$true] %s55
      %61 = dma.hbm_to_vmem [thread:$0]  %s4, 2048, %s56, [#allocation14], 128, 128, 8
    $region17: #{tpu_custom_call.1} parent=1 // pred_fallthru
      _
    // Predicated region
    $region18: #{tpu_custom_call.1} parent=1 // pred_check
      _
    $region19: #{tpu_custom_call.1} parent=1 // pred_check_branch
      %63 = sbr.rel (0) target = $region21
    $region20: #{tpu_custom_call.1} parent=1 // pred_region
      %s65 = ssub.s32 16, 16
      %66 = vsyncadd [#allocation14], %s65
      %s68 = sshll.u32 [#allocation15], 4
      %s69 = int_to_ptr.vmem [resolvable:$true] %s68
      %71 = dma.hbm_to_vmem [thread:$0]  %s5, 16, %s69, [#allocation14]
    $region21: #{tpu_custom_call.1} parent=1 // pred_fallthru
      _
    // Predicated region
    $region22: #{tpu_custom_call.1} parent=1 // pred_check
      _
    $region23: #{tpu_custom_call.1} parent=1 // pred_check_branch
      %73 = sbr.rel (0) target = $region25
    $region24: #{tpu_custom_call.1} parent=1 // pred_region
      %74 = dma.done [#allocation8], 4096
    $region25: #{tpu_custom_call.1} parent=1 // pred_fallthru
      _
    // Predicated region
    $region26: #{tpu_custom_call.1} parent=1 // pred_check
      _
    $region27: #{tpu_custom_call.1} parent=1 // pred_check_branch
      %76 = sbr.rel (0) target = $region29
    $region28: #{tpu_custom_call.1} parent=1 // pred_region
      %77 = dma.done [#allocation11], 8192
    $region29: #{tpu_custom_call.1} parent=1 // pred_fallthru
      _
    // Predicated region
    $region30: #{tpu_custom_call.1} parent=1 // pred_check
      _
    $region31: #{tpu_custom_call.1} parent=1 // pred_check_branch
      %79 = sbr.rel (0) target = $region33
    $region32: #{tpu_custom_call.1} parent=1 // pred_region
      %80 = dma.done [#allocation11], 128
    $region33: #{tpu_custom_call.1} parent=1 // pred_fallthru
      _
    // Predicated region
    $region34: #{tpu_custom_call.1} parent=1 // pred_check
      _
    $region35: #{tpu_custom_call.1} parent=1 // pred_check_branch
      %82 = sbr.rel (0) target = $region37
    $region36: #{tpu_custom_call.1} parent=1 // pred_region
      %83 = dma.done [#allocation14], 2048
    $region37: #{tpu_custom_call.1} parent=1 // pred_fallthru
      _
    // Predicated region
    $region38: #{tpu_custom_call.1} parent=1 // pred_check
      _
    $region39: #{tpu_custom_call.1} parent=1 // pred_check_branch
      %85 = sbr.rel (0) target = $region41
    $region40: #{tpu_custom_call.1} parent=1 // pred_region
      %86 = dma.done [#allocation14], 16
    $region41: #{tpu_custom_call.1} parent=1 // pred_fallthru
      _
    %p87 = scmp.eq.s32.totalorder 0, 0
    // Predicated region
    $region42: #{tpu_custom_call.1} parent=1 // pred_check
      %p88 = pneg %p87
    $region43: #{tpu_custom_call.1} parent=1 // pred_check_branch
      %90 = sbr.rel (%p88) target = $region45
    $region44: #{tpu_custom_call.1} parent=1 // pred_region
      %91 = vst [vmem:[#allocation2] sm:$0xff] 0.0
      %92 = vst [vmem:[#allocation3] sm:$0xff] 0.0
      %93 = vst [vmem:[#allocation4] sm:$0xff] 0.0
    $region45: #{tpu_custom_call.1} parent=1 // pred_fallthru
      _
    %v94 = vld [vmem:[#allocation10] sm:$0xff]
    %v95 = vld [vmem:[#allocation10 + $0x8] sm:$0xff]
    %v96 = vld [vmem:[#allocation10 + $0x10] sm:$0xff]
    %v97 = vld [vmem:[#allocation10 + $0x18] sm:$0xff]
    %v98 = vld [vmem:[#allocation10 + $0x20] sm:$0xff]
    %v99 = vld [vmem:[#allocation10 + $0x28] sm:$0xff]
    %v100 = vld [vmem:[#allocation10 + $0x30] sm:$0xff]
    %v101 = vld [vmem:[#allocation10 + $0x38] sm:$0xff]
    %v102 = vld [vmem:[#allocation10 + $0x40] sm:$0xff]
    %v103 = vld [vmem:[#allocation10 + $0x48] sm:$0xff]
    %v104 = vld [vmem:[#allocation10 + $0x50] sm:$0xff]
    %v105 = vld [vmem:[#allocation10 + $0x58] sm:$0xff]
    %v106 = vld [vmem:[#allocation10 + $0x60] sm:$0xff]
    %v107 = vld [vmem:[#allocation10 + $0x68] sm:$0xff]
    %v108 = vld [vmem:[#allocation10 + $0x70] sm:$0xff]
    %v109 = vld [vmem:[#allocation10 + $0x78] sm:$0xff]
    %v110 = vld [vmem:[#allocation10 + $0x80] sm:$0xff]
    %v111 = vld [vmem:[#allocation10 + $0x88] sm:$0xff]
    %v112 = vld [vmem:[#allocation10 + $0x90] sm:$0xff]
    %v113 = vld [vmem:[#allocation10 + $0x98] sm:$0xff]
    %v114 = vld [vmem:[#allocation10 + $0xa0] sm:$0xff]
    %v115 = vld [vmem:[#allocation10 + $0xa8] sm:$0xff]
    %v116 = vld [vmem:[#allocation10 + $0xb0] sm:$0xff]
    %v117 = vld [vmem:[#allocation10 + $0xb8] sm:$0xff]
    %v118 = vld [vmem:[#allocation10 + $0xc0] sm:$0xff]
    %v119 = vld [vmem:[#allocation10 + $0xc8] sm:$0xff]
    %v120 = vld [vmem:[#allocation10 + $0xd0] sm:$0xff]
    %v121 = vld [vmem:[#allocation10 + $0xd8] sm:$0xff]
    %v122 = vld [vmem:[#allocation10 + $0xe0] sm:$0xff]
    %v123 = vld [vmem:[#allocation10 + $0xe8] sm:$0xff]
    %v124 = vld [vmem:[#allocation10 + $0xf0] sm:$0xff]
    %v125 = vld [vmem:[#allocation10 + $0xf8] sm:$0xff]
    %v126 = vld [vmem:[#allocation10 + $0x100] sm:$0xff]
    %v127 = vld [vmem:[#allocation10 + $0x108] sm:$0xff]
    %v128 = vld [vmem:[#allocation10 + $0x110] sm:$0xff]
    %v129 = vld [vmem:[#allocation10 + $0x118] sm:$0xff]
    %v130 = vld [vmem:[#allocation10 + $0x120] sm:$0xff]
    %v131 = vld [vmem:[#allocation10 + $0x128] sm:$0xff]
    %v132 = vld [vmem:[#allocation10 + $0x130] sm:$0xff]
    %v133 = vld [vmem:[#allocation10 + $0x138] sm:$0xff]
    %v134 = vld [vmem:[#allocation10 + $0x140] sm:$0xff]
    %v135 = vld [vmem:[#allocation10 + $0x148] sm:$0xff]
    %v136 = vld [vmem:[#allocation10 + $0x150] sm:$0xff]
    %v137 = vld [vmem:[#allocation10 + $0x158] sm:$0xff]
    %v138 = vld [vmem:[#allocation10 + $0x160] sm:$0xff]
    %v139 = vld [vmem:[#allocation10 + $0x168] sm:$0xff]
    %v140 = vld [vmem:[#allocation10 + $0x170] sm:$0xff]
    %v141 = vld [vmem:[#allocation10 + $0x178] sm:$0xff]
    %v142 = vld [vmem:[#allocation10 + $0x180] sm:$0xff]
    %v143 = vld [vmem:[#allocation10 + $0x188] sm:$0xff]
    %v144 = vld [vmem:[#allocation10 + $0x190] sm:$0xff]
    %v145 = vld [vmem:[#allocation10 + $0x198] sm:$0xff]
    %v146 = vld [vmem:[#allocation10 + $0x1a0] sm:$0xff]
    %v147 = vld [vmem:[#allocation10 + $0x1a8] sm:$0xff]
    %v148 = vld [vmem:[#allocation10 + $0x1b0] sm:$0xff]
    %v149 = vld [vmem:[#allocation10 + $0x1b8] sm:$0xff]
    %v150 = vld [vmem:[#allocation10 + $0x1c0] sm:$0xff]
    %v151 = vld [vmem:[#allocation10 + $0x1c8] sm:$0xff]
    %v152 = vld [vmem:[#allocation10 + $0x1d0] sm:$0xff]
    %v153 = vld [vmem:[#allocation10 + $0x1d8] sm:$0xff]
    %v154 = vld [vmem:[#allocation10 + $0x1e0] sm:$0xff]
    %v155 = vld [vmem:[#allocation10 + $0x1e8] sm:$0xff]
    %v156 = vld [vmem:[#allocation10 + $0x1f0] sm:$0xff]
    %v157 = vld [vmem:[#allocation10 + $0x1f8] sm:$0xff]
    %v158 = vld [vmem:[#allocation12] sm:$0xff]
    %s159 = smul.u32 0, 8
    %s160 = sld [smem:[#allocation6]]
    %s161 = ssub.s32 %s160, %s159
    %p162 = scmp.gt.s32.totalorder %s161, 0
    %s163 = scalar_select %p162, %s161, 0
    %p164 = scmp.lt.s32.totalorder %s163, 8
    %s165 = scalar_select %p164, %s163, 8
    %v166 = vld [vmem:[#allocation2] sm:$0xff]
    %v167 = vld [vmem:[#allocation3] sm:$0xff]
    %v168 = vld [vmem:[#allocation4] sm:$0xff]
    // While loop
    $region46: #{tpu_custom_call.1} parent=1 // loop_pre_header
      _
    $region47: #{tpu_custom_call.1} parent=1 // loop_header
      %s170 = sphi 0, %s172
      %p171 = scmp.ge.s32.totalorder %s170, %s165
      %v175 = vphi %v166, %v355
      %v176 = vphi %v167, %v353
      %v177 = vphi %v168, %v363
    $region48: #{tpu_custom_call.1} parent=1 // loop_header_branch
      %174 = sbr.rel (%p171) target = $region52
    $region49: #{tpu_custom_call.1} parent=1 // loop_body
      %s178 = sadd.s32 %s159, %s170
      %s179 = smul.u32 %s170, 4
      %s180 = smul.addr %s179, 8
      %s181 = scalar_lea.vmem [#allocation7], %s180
      %v182 = vld [vmem:[%s181] sm:$0xff]
      %v183 = vld [vmem:[%s181 + $0x8] sm:$0xff]
      %v184 = vld [vmem:[%s181 + $0x10] sm:$0xff]
      %v185 = vld [vmem:[%s181 + $0x18] sm:$0xff]
      %186 = vmatprep.subr.mxu0 %v95
      %187 = vmatpush1.msra.mxu0 %v94
      %188 = vmatprep.subr.mxu0 %v99
      %189 = vmatpush1.msra.mxu0 %v98
      %190 = vmatprep.subr.mxu0 %v103
      %191 = vmatpush1.msra.mxu0 %v102
      %192 = vmatprep.subr.mxu0 %v107
      %193 = vmatpush1.msra.mxu0 %v106
      %194 = vmatprep.subr.mxu0 %v111
      %195 = vmatpush1.msra.mxu0 %v110
      %196 = vmatprep.subr.mxu0 %v115
      %197 = vmatpush1.msra.mxu0 %v114
      %198 = vmatprep.subr.mxu0 %v119
      %199 = vmatpush1.msra.mxu0 %v118
      %200 = vmatprep.subr.mxu0 %v123
      %201 = vmatpush1.msra.mxu0 %v122
      %202 = vmatprep.subr.mxu0 %v127
      %203 = vmatpush1.msra.mxu0 %v126
      %204 = vmatprep.subr.mxu0 %v131
      %205 = vmatpush1.msra.mxu0 %v130
      %206 = vmatprep.subr.mxu0 %v135
      %207 = vmatpush1.msra.mxu0 %v134
      %208 = vmatprep.subr.mxu0 %v139
      %209 = vmatpush1.msra.mxu0 %v138
      %210 = vmatprep.subr.mxu0 %v143
      %211 = vmatpush1.msra.mxu0 %v142
      %212 = vmatprep.subr.mxu0 %v147
      %213 = vmatpush1.msra.mxu0 %v146
      %214 = vmatprep.subr.mxu0 %v151
      %215 = vmatpush1.msra.mxu0 %v150
      %216 = vmatprep.subr.mxu0 %v155
      %217 = vmatpush1.msra.mxu0 %v154
      %218 = vmatprep.subr.mxu0 0.0
      %219 = vmatpush1.msra.mxu0 0.0
      %220 = vmatprep.subr.mxu0 0.0
      %221 = vmatpush1.msra.mxu0 0.0
      %222 = vmatprep.subr.mxu0 0.0
      %223 = vmatpush1.msra.mxu0 0.0
      %224 = vmatprep.subr.mxu0 0.0
      %225 = vmatpush1.msra.mxu0 0.0
      %226 = vmatprep.subr.mxu0 0.0
      %227 = vmatpush1.msra.mxu0 0.0
      %228 = vmatprep.subr.mxu0 0.0
      %229 = vmatpush1.msra.mxu0 0.0
      %230 = vmatprep.subr.mxu0 0.0
      %231 = vmatpush1.msra.mxu0 0.0
      %232 = vmatprep.subr.mxu0 0.0
      %233 = vmatpush1.msra.mxu0 0.0
      %234 = vmatprep.subr.mxu0 0.0
      %235 = vmatpush1.msra.mxu0 0.0
      %236 = vmatprep.subr.mxu0 0.0
      %237 = vmatpush1.msra.mxu0 0.0
      %238 = vmatprep.subr.mxu0 0.0
      %239 = vmatpush1.msra.mxu0 0.0
      %240 = vmatprep.subr.mxu0 0.0
      %241 = vmatpush1.msra.mxu0 0.0
      %242 = vmatprep.subr.mxu0 0.0
      %243 = vmatpush1.msra.mxu0 0.0
      %244 = vmatprep.subr.mxu0 0.0
      %245 = vmatpush1.msra.mxu0 0.0
      %246 = vmatprep.subr.mxu0 0.0
      %247 = vmatpush1.msra.mxu0 0.0
      %248 = vmatprep.subr.mxu0 0.0
      %249 = vmatpush1.msra.mxu0 0.0
      %250 = vmatprep.mubr.f32.mxu0 0.0
      %251 = vmatmul.mubr.f32.gmra.mrb[0].mxu0 %v175
      %v252 = vpop.f32.mrb[0].mxu0
      %v253 = vadd.f32 0.0, %v252
      %v254 = vpop.f32.mrb[0].mxu0
      %v255 = vadd.f32 0.0, %v254
      %256 = vdwg.mxu0
      %257 = vmatprep.subr.mxu0 %v97
      %258 = vmatpush1.msra.mxu0 %v96
      %259 = vmatprep.subr.mxu0 %v101
      %260 = vmatpush1.msra.mxu0 %v100
      %261 = vmatprep.subr.mxu0 %v105
      %262 = vmatpush1.msra.mxu0 %v104
      %263 = vmatprep.subr.mxu0 %v109
      %264 = vmatpush1.msra.mxu0 %v108
      %265 = vmatprep.subr.mxu0 %v113
      %266 = vmatpush1.msra.mxu0 %v112
      %267 = vmatprep.subr.mxu0 %v117
      %268 = vmatpush1.msra.mxu0 %v116
      %269 = vmatprep.subr.mxu0 %v121
      %270 = vmatpush1.msra.mxu0 %v120
      %271 = vmatprep.subr.mxu0 %v125
      %272 = vmatpush1.msra.mxu0 %v124
      %273 = vmatprep.subr.mxu0 %v129
      %274 = vmatpush1.msra.mxu0 %v128
      %275 = vmatprep.subr.mxu0 %v133
      %276 = vmatpush1.msra.mxu0 %v132
      %277 = vmatprep.subr.mxu0 %v137
      %278 = vmatpush1.msra.mxu0 %v136
      %279 = vmatprep.subr.mxu0 %v141
      %280 = vmatpush1.msra.mxu0 %v140
      %281 = vmatprep.subr.mxu0 %v145
      %282 = vmatpush1.msra.mxu0 %v144
      %283 = vmatprep.subr.mxu0 %v149
      %284 = vmatpush1.msra.mxu0 %v148
      %285 = vmatprep.subr.mxu0 %v153
      %286 = vmatpush1.msra.mxu0 %v152
      %287 = vmatprep.subr.mxu0 %v157
      %288 = vmatpush1.msra.mxu0 %v156
      %289 = vmatprep.subr.mxu0 0.0
      %290 = vmatpush1.msra.mxu0 0.0
      %291 = vmatprep.subr.mxu0 0.0
      %292 = vmatpush1.msra.mxu0 0.0
      %293 = vmatprep.subr.mxu0 0.0
      %294 = vmatpush1.msra.mxu0 0.0
      %295 = vmatprep.subr.mxu0 0.0
      %296 = vmatpush1.msra.mxu0 0.0
      %297 = vmatprep.subr.mxu0 0.0
      %298 = vmatpush1.msra.mxu0 0.0
      %299 = vmatprep.subr.mxu0 0.0
      %300 = vmatpush1.msra.mxu0 0.0
      %301 = vmatprep.subr.mxu0 0.0
      %302 = vmatpush1.msra.mxu0 0.0
      %303 = vmatprep.subr.mxu0 0.0
      %304 = vmatpush1.msra.mxu0 0.0
      %305 = vmatprep.subr.mxu0 0.0
      %306 = vmatpush1.msra.mxu0 0.0
      %307 = vmatprep.subr.mxu0 0.0
      %308 = vmatpush1.msra.mxu0 0.0
      %309 = vmatprep.subr.mxu0 0.0
      %310 = vmatpush1.msra.mxu0 0.0
      %311 = vmatprep.subr.mxu0 0.0
      %312 = vmatpush1.msra.mxu0 0.0
      %313 = vmatprep.subr.mxu0 0.0
      %314 = vmatpush1.msra.mxu0 0.0
      %315 = vmatprep.subr.mxu0 0.0
      %316 = vmatpush1.msra.mxu0 0.0
      %317 = vmatprep.subr.mxu0 0.0
      %318 = vmatpush1.msra.mxu0 0.0
      %319 = vmatprep.subr.mxu0 0.0
      %320 = vmatpush1.msra.mxu0 0.0
      %321 = vmatprep.mubr.f32.mxu0 0.0
      %322 = vmatmul.mubr.f32.gmra.mrb[0].mxu0 %v175
      %v323 = vpop.f32.mrb[0].mxu0
      %v324 = vadd.f32 0.0, %v323
      %v325 = vpop.f32.mrb[0].mxu0
      %v326 = vadd.f32 0.0, %v325
      %327 = vdwg.mxu0
      %v328 = vadd.f32 %v182, %v253
      %v329 = vadd.f32 %v183, %v255
      %v330 = vadd.f32 %v184, %v324
      %v331 = vadd.f32 %v185, %v326
      %v332 = vxor.u32 %v328, 2147483648
      %v333 = vxor.u32 %v329, 2147483648
      %v334 = vxor.u32 %v330, 2147483648
      %v335 = vmul.f32 %v332, 1.442695
      %v336 = vpow.pop %v335
      %v337 = vmul.f32 %v333, 1.442695
      %v338 = vpow.pop %v337
      %v339 = vmul.f32 %v334, 1.442695
      %v340 = vpow.pop %v339
      %v341 = vadd.f32 %v336, 1.0
      %v342 = vadd.f32 %v338, 1.0
      %v343 = vadd.f32 %v340, 1.0
      %v344 = vrcp.pop %v341
      %v345 = vmul.f32 1.0, %v344
      %v346 = vrcp.pop %v342
      %v347 = vmul.f32 1.0, %v346
      %v348 = vrcp.pop %v343
      %v349 = vmul.f32 1.0, %v348
      %v350 = vtanh.pop %v331
      %v351 = vmul.f32 %v347, %v176
      %v352 = vmul.f32 %v345, %v350
      %v353 = vadd.f32 %v351, %v352
      %v354 = vtanh.pop %v353
      %v355 = vmul.f32 %v349, %v354
      %v356 = vstv %s178
      %vm357 = vcmp.eq.s32.totalorder %v158, %v356
      %v358 = vsel %vm357, 1, 0
      %359 = vset.pattern.permute.xlu0 0
      %360 = vperm.xlu0 %359, %v358
      %v361 = vpop.permute.xlu0 %360
      %vm362 = vcmp.eq.s32.totalorder %v361, 1
      %v363 = vsel %vm362, %v355, %v177
    $region50: #{tpu_custom_call.1} parent=1 // loop_footer
      %s172 = sadd.s32 %s170, 1
    $region51: #{tpu_custom_call.1} parent=1 // loop_footer_branch
      %169 = sbr.rel target = $region47
    $region52: #{tpu_custom_call.1} parent=1 // loop_exit
      _
    %364 = vst [vmem:[#allocation2] sm:$0xff] %v175
    %365 = vst [vmem:[#allocation3] sm:$0xff] %v176
    %366 = vst [vmem:[#allocation4] sm:$0xff] %v177
    // Predicated region
    $region53: #{tpu_custom_call.1} parent=1 // pred_check
      %p367 = pneg %p87
    $region54: #{tpu_custom_call.1} parent=1 // pred_check_branch
      %369 = sbr.rel (%p367) target = $region56
    $region55: #{tpu_custom_call.1} parent=1 // pred_region
      %v370 = vld [vmem:[#allocation4] sm:$0xff]
      %v371 = vld [vmem:[#allocation13] sm:$0xff]
      %v372 = vld [vmem:[#allocation13 + $0x8] sm:$0xff]
      %v373 = vld [vmem:[#allocation13 + $0x10] sm:$0xff]
      %v374 = vld [vmem:[#allocation13 + $0x18] sm:$0xff]
      %v375 = vld [vmem:[#allocation13 + $0x20] sm:$0xff]
      %v376 = vld [vmem:[#allocation13 + $0x28] sm:$0xff]
      %v377 = vld [vmem:[#allocation13 + $0x30] sm:$0xff]
      %v378 = vld [vmem:[#allocation13 + $0x38] sm:$0xff]
      %v379 = vld [vmem:[#allocation13 + $0x40] sm:$0xff]
      %v380 = vld [vmem:[#allocation13 + $0x48] sm:$0xff]
      %v381 = vld [vmem:[#allocation13 + $0x50] sm:$0xff]
      %v382 = vld [vmem:[#allocation13 + $0x58] sm:$0xff]
      %v383 = vld [vmem:[#allocation13 + $0x60] sm:$0xff]
      %v384 = vld [vmem:[#allocation13 + $0x68] sm:$0xff]
      %v385 = vld [vmem:[#allocation13 + $0x70] sm:$0xff]
      %v386 = vld [vmem:[#allocation13 + $0x78] sm:$0xff]
      %v387 = vld [vmem:[#allocation15] sm:$0x1]
      %v389 = vlaneseq
      %v390 = vshrl.u32 %v389, 7
      %v391 = vsub.s32 0, %v390
      %v392 = vrot.slane %v387, %v391
      %394 = vmatprep.subr.mxu0 0.0
      %395 = vmatpush1.msra.mxu0 %v371
      %396 = vmatprep.subr.mxu0 0.0
      %397 = vmatpush1.msra.mxu0 %v372
      %398 = vmatprep.subr.mxu0 0.0
      %399 = vmatpush1.msra.mxu0 %v373
      %400 = vmatprep.subr.mxu0 0.0
      %401 = vmatpush1.msra.mxu0 %v374
      %402 = vmatprep.subr.mxu0 0.0
      %403 = vmatpush1.msra.mxu0 %v375
      %404 = vmatprep.subr.mxu0 0.0
      %405 = vmatpush1.msra.mxu0 %v376
      %406 = vmatprep.subr.mxu0 0.0
      %407 = vmatpush1.msra.mxu0 %v377
      %408 = vmatprep.subr.mxu0 0.0
      %409 = vmatpush1.msra.mxu0 %v378
      %410 = vmatprep.subr.mxu0 0.0
      %411 = vmatpush1.msra.mxu0 %v379
      %412 = vmatprep.subr.mxu0 0.0
      %413 = vmatpush1.msra.mxu0 %v380
      %414 = vmatprep.subr.mxu0 0.0
      %415 = vmatpush1.msra.mxu0 %v381
      %416 = vmatprep.subr.mxu0 0.0
      %417 = vmatpush1.msra.mxu0 %v382
      %418 = vmatprep.subr.mxu0 0.0
      %419 = vmatpush1.msra.mxu0 %v383
      %420 = vmatprep.subr.mxu0 0.0
      %421 = vmatpush1.msra.mxu0 %v384
      %422 = vmatprep.subr.mxu0 0.0
      %423 = vmatpush1.msra.mxu0 %v385
      %424 = vmatprep.subr.mxu0 0.0
      %425 = vmatpush1.msra.mxu0 %v386
      %426 = vmatprep.subr.mxu0 0.0
      %427 = vmatpush1.msra.mxu0 0.0
      %428 = vmatprep.subr.mxu0 0.0
      %429 = vmatpush1.msra.mxu0 0.0
      %430 = vmatprep.subr.mxu0 0.0
      %431 = vmatpush1.msra.mxu0 0.0
      %432 = vmatprep.subr.mxu0 0.0
      %433 = vmatpush1.msra.mxu0 0.0
      %434 = vmatprep.subr.mxu0 0.0
      %435 = vmatpush1.msra.mxu0 0.0
      %436 = vmatprep.subr.mxu0 0.0
      %437 = vmatpush1.msra.mxu0 0.0
      %438 = vmatprep.subr.mxu0 0.0
      %439 = vmatpush1.msra.mxu0 0.0
      %440 = vmatprep.subr.mxu0 0.0
      %441 = vmatpush1.msra.mxu0 0.0
      %442 = vmatprep.subr.mxu0 0.0
      %443 = vmatpush1.msra.mxu0 0.0
      %444 = vmatprep.subr.mxu0 0.0
      %445 = vmatpush1.msra.mxu0 0.0
      %446 = vmatprep.subr.mxu0 0.0
      %447 = vmatpush1.msra.mxu0 0.0
      %448 = vmatprep.subr.mxu0 0.0
      %449 = vmatpush1.msra.mxu0 0.0
      %450 = vmatprep.subr.mxu0 0.0
      %451 = vmatpush1.msra.mxu0 0.0
      %452 = vmatprep.subr.mxu0 0.0
      %453 = vmatpush1.msra.mxu0 0.0
      %454 = vmatprep.subr.mxu0 0.0
      %455 = vmatpush1.msra.mxu0 0.0
      %456 = vmatprep.subr.mxu0 0.0
      %457 = vmatpush1.msra.mxu0 0.0
      %458 = vmatprep.mubr.f32.mxu0 0.0
      %459 = vmatmul.mubr.f32.gmra.mrb[0].mxu0 %v370
      %v460 = vpop.f32.mrb[0].mxu0
      %v461 = vadd.f32 %v392, %v460
      %v462 = vpop.f32.mrb[0].mxu0
      %463 = vdwg.mxu0
      %464 = vst [vmem:[#allocation16] sm:$0xff] %v461
    $region56: #{tpu_custom_call.1} parent=1 // pred_fallthru
      _
    // Predicated region
    $region57: #{tpu_custom_call.1} parent=1 // pred_check
      _
    $region58: #{tpu_custom_call.1} parent=1 // pred_check_branch
      %466 = sbr.rel (0) target = $region60
    $region59: #{tpu_custom_call.1} parent=1 // pred_region
      %s468 = ssub.s32 128, 128
      %469 = vsyncadd [#allocation9], %s468
      %s471 = sshll.u32 [#allocation16], 4
      %s472 = int_to_ptr.vmem [resolvable:$true] %s471
      %474 = dma.vmem_to_hbm [thread:$0]  %s472, 128, %s6, [#allocation9]
    $region60: #{tpu_custom_call.1} parent=1 // pred_fallthru
      _
    // Predicated region
    $region61: #{tpu_custom_call.1} parent=1 // pred_check
      _
    $region62: #{tpu_custom_call.1} parent=1 // pred_check_branch
      %476 = sbr.rel (0) target = $region64
    $region63: #{tpu_custom_call.1} parent=1 // pred_region
      %477 = dma.done [#allocation9], 128
    $region64: #{tpu_custom_call.1} parent=1 // pred_fallthru
      _
    %478 = vsyncpa [#allocation8], 1
    %479 = vsyncpa [#allocation11], 1
    %480 = vsyncpa [#allocation14], 1
    %481 = vsyncpa [#allocation9], 1

</llo_original>
